<compile_context>
chip_gen: v5e
topology: v5e:2x2
jax: 0.10.0
libtpu: 0.0.40
codegen_flags: <defaults>
</compile_context>

<pallas_src>
import jax
import jax.numpy as jnp
from jax.experimental import pallas as pl
from jax.experimental.pallas import tpu as pltpu

WINDOW_SIZES = (2, 3, 4)   # `window_sizes` global in the reference module

_MIB = 1024 * 1024


def _round_up(x, m):
    return ((x + m - 1) // m) * m


def _vmem_limit_bytes():
    """Chip-aware VMEM cap: ~96 MiB on v5e/v6e (128 MiB phys), ~48 MiB on v7x (64 MiB)."""
    cap = 64 * _MIB
    try:
        cap = int(getattr(pltpu.get_tpu_info(), "vmem_capacity_bytes", cap))
    except Exception:
        pass
    return int(min(96 * _MIB, max(32 * _MIB, (3 * cap) // 4)))


def textcnn_forward(tokens, params, *, block_b=None):
    """tokens: (B, L) int32 token ids -> (B, D) logits (eval-mode forward)."""
    table = params['embed']                       # (V, E) f32
    V, E = table.shape
    B, L = tokens.shape
    K = params['conv_b'][0].shape[-1]
    D = params['fc_w'].shape[-1]
    CB = len(WINDOW_SIZES) * K                    # fc input features
    assert L >= max(WINDOW_SIZES), "sequence shorter than largest conv window"

    # Gather is a one-hot matmul against a VMEM-resident table; only valid while
    # the table (and a (rows, V) one-hot tile) fit VMEM.
    # TODO(synk): large-vocab fallback — keep the table in HBM (pl.ANY) and gather
    # rows with chunked make_async_copy DMAs (single chunk-sized wait per chunk).
    table_bf = table.astype(jnp.bfloat16)
    if V * E * 2 > 16 * _MIB:
        raise NotImplementedError("embedding table too large for VMEM-resident gather")

    # ---- pack all conv weights into ONE lane-dense matmul operand ----------
    # Column block [off_w + j*K : off_w + (j+1)*K] holds conv_w[w][j]  (E, K).
    w_cols = []
    for i, ws in enumerate(WINDOW_SIZES):
        w = params['conv_w'][i]                   # (ws, E, K)
        w_cols.append(jnp.transpose(w, (1, 0, 2)).reshape(E, ws * K))
    w_all = jnp.concatenate(w_cols, axis=1)       # (E, C) f32
    C = w_all.shape[1]
    Cpad = _round_up(C, 128)                      # lane-dense conv matmul output
    w_all = jnp.zeros((E, Cpad), jnp.float32).at[:, :C].set(w_all).astype(jnp.bfloat16)

    # Conv biases packed onto each window's j==0 column block; added to y once.
    cb = jnp.zeros((1, Cpad), jnp.float32)
    off = 0
    for i, ws in enumerate(WINDOW_SIZES):
        cb = cb.at[:, off:off + K].set(params['conv_b'][i].reshape(1, K))
        off += ws * K

    # ---- lane-dense fc output: pad D up to a multiple of 128 ----------------
    Dpad = _round_up(D, 128)
    fc_w = jnp.zeros((CB, Dpad), jnp.float32).at[:, :D].set(params['fc_w'])
    fc_b = jnp.zeros((1, Dpad), jnp.float32).at[:, :D].set(params['fc_b'].reshape(1, D))

    # ---- batch tiling --------------------------------------------------------
    if block_b is None:
        # Fill the MXU / amortize per-grid-step overhead: target >= 512 rows.
        tb = _round_up(max(8, -(-512 // L)), 8)
        block_b = min(tb, _round_up(B, 8))
    TB = int(block_b)
    assert TB % 8 == 0, "batch tile must be a multiple of 8 (sublane tiling)"

    # Conservative per-block VMEM estimate (one-hot + activations); shrink if needed.
    def _block_bytes(tb):
        rows = tb * L
        return (rows * V * 2          # one-hot (bf16)
                + rows * E * 6        # gathered embeddings f32 + bf16 copy
                + rows * Cpad * 4     # conv matmul output (f32)
                + 4 * tb * 128 * 4)   # token + output blocks, double-buffered
    while TB > 8 and _block_bytes(TB) > 20 * _MIB:
        TB -= 8

    Bp = _round_up(B, TB)
    nblk = Bp // TB
    if nblk > 1 and nblk % 2 == 1:
        # v7x: keep the 'parallel' grid axis even so both TensorCores stay busy
        # (one extra padded block is cheap on single-TC v5e/v6e).
        nblk += 1
        Bp += TB
    toks = tokens.astype(jnp.int32)
    if Bp != B:
        toks = jnp.pad(toks, ((0, Bp - B), (0, 0)))       # padded rows: token 0

    def kernel(tok_ref, table_ref, w_all_ref, cb_ref, fcw_ref, fcb_ref, out_ref):
        # -- embedding gather as a one-hot bf16 MXU matmul (exact row select) --
        tok = tok_ref[...]                                            # (TB, L) i32
        iota_v = jax.lax.broadcasted_iota(jnp.int32, (TB, L, V), 2)
        onehot = (iota_v == tok[:, :, None]).astype(jnp.bfloat16)
        onehot = onehot.reshape(TB * L, V)
        emb = jnp.dot(onehot, table_ref[...],
                      preferred_element_type=jnp.float32)             # (TB*L, E)
        emb_bf = emb.astype(jnp.bfloat16)                             # exact (bf16 rows)

        # -- every conv window/shift as ONE (TB*L, E) @ (E, Cpad) bf16 matmul --
        y = jnp.dot(emb_bf, w_all_ref[...],
                    preferred_element_type=jnp.float32)               # (TB*L, Cpad)
        y = y.reshape(TB, L, Cpad) + cb_ref[...].reshape(1, 1, Cpad)  # bias on j==0 cols

        # -- shifted adds + ReLU + max-pool over time (f32 VPU/XLU) ------------
        # TODO(synk): for long L, do the time shifts with pltpu.roll (XLU) instead
        # of sublane-offset slices; at L=16 the slice cost is negligible.
        feats = []
        col = 0
        for ws in WINDOW_SIZES:
            Lout = L - ws + 1
            conv = y[:, 0:Lout, col:col + K]
            for j in range(1, ws):
                conv = conv + y[:, j:j + Lout, col + j * K:col + (j + 1) * K]
            conv = jnp.maximum(conv, 0.0)
            feats.append(jnp.max(conv, axis=1))                       # (TB, K)
            col += ws * K
        feat = jnp.concatenate(feats, axis=1)                         # (TB, CB)

        # -- fc: (TB, CB) @ (CB, Dpad) + bias, lane-dense output ---------------
        out_ref[...] = (jnp.dot(feat, fcw_ref[...],
                                preferred_element_type=jnp.float32)
                        + fcb_ref[...])

    out = pl.pallas_call(
        kernel,
        out_shape=jax.ShapeDtypeStruct((Bp, Dpad), jnp.float32),
        grid_spec=pltpu.PrefetchScalarGridSpec(
            num_scalar_prefetch=0,
            grid=(nblk,),
            in_specs=[
                pl.BlockSpec((TB, L), lambda i: (i, 0)),        # tokens (int32)
                pl.BlockSpec((V, E), lambda i: (0, 0)),         # embed table (bf16, VMEM)
                pl.BlockSpec((E, Cpad), lambda i: (0, 0)),      # packed conv weights
                pl.BlockSpec((1, Cpad), lambda i: (0, 0)),      # packed conv bias
                pl.BlockSpec((CB, Dpad), lambda i: (0, 0)),     # fc weight
                pl.BlockSpec((1, Dpad), lambda i: (0, 0)),      # fc bias
            ],
            out_specs=pl.BlockSpec((TB, Dpad), lambda i: (i, 0)),
        ),
        compiler_params=pltpu.CompilerParams(
            dimension_semantics=("parallel",),        # batch blocks across v7x's 2 TCs
            vmem_limit_bytes=_vmem_limit_bytes(),
        ),
    )(toks, table_bf, w_all, cb, fc_w, fc_b)

    return out[:B, :D]


def textcnn_reference(tokens, params):
    """Pure-JAX reference mirroring the PyTorch forward (eval mode).

    Conv matmul inputs are cast to bf16 to mirror the kernel's MXU precision
    (f32 accumulation everywhere, elementwise work in f32).
    """
    emb = params['embed'][tokens]                 # (B, L, E) f32
    emb_bf = emb.astype(jnp.bfloat16)
    B, L, E = emb.shape
    feats = []
    for i, ws in enumerate(WINDOW_SIZES):
        w = params['conv_w'][i].astype(jnp.bfloat16)    # (ws, E, K)
        b = params['conv_b'][i]                         # (1, K)
        Lout = L - ws + 1
        conv = jnp.zeros((B, Lout, w.shape[2]), jnp.float32)
        for j in range(ws):
            conv = conv + jnp.einsum('bte,ek->btk', emb_bf[:, j:j + Lout, :], w[j],
                                     preferred_element_type=jnp.float32)
        conv = jnp.maximum(conv + b.reshape(1, 1, -1), 0.0)
        feats.append(jnp.max(conv, axis=1))
    feat = jnp.concatenate(feats, axis=1)
    return feat @ params['fc_w'] + params['fc_b'].reshape(1, -1)


def init_params(key, vocab_max, embed_dim, kernel_num, output_dim):
    keys = jax.random.split(key, 2 + 2 * len(WINDOW_SIZES) + 2)
    params = {}
    params['embed'] = jax.random.normal(keys[0], (vocab_max, embed_dim), jnp.float32) * 0.1

    conv_w, conv_b = [], []
    for i, ws in enumerate(WINDOW_SIZES):
        # PyTorch Conv2d weight is (K, 1, ws, E); store as (ws, E, K).
        w_torch = jax.random.normal(keys[1 + 2 * i],
                                    (kernel_num, 1, ws, embed_dim), jnp.float32) * 0.1
        conv_w.append(jnp.transpose(w_torch[:, 0], (1, 2, 0)))
        conv_b.append(jax.random.normal(keys[2 + 2 * i], (1, kernel_num), jnp.float32) * 0.1)
    params['conv_w'] = conv_w
    params['conv_b'] = conv_b

    in_feat = len(WINDOW_SIZES) * kernel_num
    # PyTorch Linear weight is (D, in); store transposed (in, D).
    params['fc_w'] = jax.random.normal(keys[-2], (in_feat, output_dim), jnp.float32) * 0.1
    params['fc_b'] = jax.random.normal(keys[-1], (1, output_dim), jnp.float32) * 0.1
    return params


if __name__ == "__main__":
    # Small shapes consistent with the module's forward.
    B, L = 20, 16                # batch (non-multiple of the tile, exercises padding), seq len
    VOCAB, E = 50, 32            # vocab_max, embed_dim
    K, D = 8, 4                  # kernel_num, output_dim

    key = jax.random.PRNGKey(0)
    k_tok, k_par = jax.random.split(key)
    tokens = jax.random.randint(k_tok, (B, L), 0, VOCAB, dtype=jnp.int32)
    params = init_params(k_par, VOCAB, E, K, D)

    ref = textcnn_reference(tokens, params)

    # Small explicit tile: exercises multi-block grid, batch padding and even-nblk logic.
    out_small = jax.block_until_ready(textcnn_forward(tokens, params, block_b=8))
    # Auto tile: single large batch block (default fast path).
    out_auto = jax.block_until_ready(textcnn_forward(tokens, params))

    for out in (out_small, out_auto):
        assert out.shape == (B, D)
        assert jnp.allclose(out, ref, atol=1e-3, rtol=1e-3), (out, ref)

    print("KERNEL_OK")
</pallas_src>

<mosaic_0001>
module attributes {stable_mosaic.version = 11 : i64} {
  func.func @kernel(%arg0: i32, %arg1: memref<8x16xi32, #tpu.memory_space<vmem>>, %arg2: memref<50x32xbf16, #tpu.memory_space<vmem>>, %arg3: memref<32x128xbf16, #tpu.memory_space<vmem>>, %arg4: memref<1x128xf32, #tpu.memory_space<vmem>>, %arg5: memref<24x128xf32, #tpu.memory_space<vmem>>, %arg6: memref<1x128xf32, #tpu.memory_space<vmem>>, %arg7: memref<8x128xf32, #tpu.memory_space<vmem>>) attributes {dimension_semantics = [#tpu.dimension_semantics<parallel>], iteration_bounds = array<i64: 4>, scalar_prefetch = 0 : i64, scratch_operands = 0 : i64, tpu.core_type = #tpu.core_type<tc>, window_params = [{transform_indices = @transform_0, window_bounds = array<i64: 8, 16>}, {pipeline_mode = #tpu.pipeline_mode<synchronous>, transform_indices = @transform_1, window_bounds = array<i64: 50, 32>}, {pipeline_mode = #tpu.pipeline_mode<synchronous>, transform_indices = @transform_2, window_bounds = array<i64: 32, 128>}, {pipeline_mode = #tpu.pipeline_mode<synchronous>, transform_indices = @transform_3, window_bounds = array<i64: 1, 128>}, {pipeline_mode = #tpu.pipeline_mode<synchronous>, transform_indices = @transform_4, window_bounds = array<i64: 24, 128>}, {pipeline_mode = #tpu.pipeline_mode<synchronous>, transform_indices = @transform_5, window_bounds = array<i64: 1, 128>}, {transform_indices = @transform_6, window_bounds = array<i64: 8, 128>}]} {
    %c0 = arith.constant 0 : index
    %c0_0 = arith.constant 0 : index
    %0 = vector.load %arg1[%c0, %c0_0] : memref<8x16xi32, #tpu.memory_space<vmem>>, vector<8x16xi32>
    %1 = tpu.iota {dimensions = array<i32: 2>} : vector<8x16x50xi32>
    %2 = vector.shape_cast %0 : vector<8x16xi32> to vector<8x16x1xi32>
    %3 = vector.broadcast %2 : vector<8x16x1xi32> to vector<8x16x50xi32>
    %4 = arith.cmpi eq, %1, %3 : vector<8x16x50xi32>
    %5 = arith.extui %4 : vector<8x16x50xi1> to vector<8x16x50xi32>
    %6 = arith.sitofp %5 : vector<8x16x50xi32> to vector<8x16x50xf32>
    %7 = arith.truncf %6 : vector<8x16x50xf32> to vector<8x16x50xbf16>
    %8 = vector.shape_cast %7 : vector<8x16x50xbf16> to vector<128x50xbf16>
    %c0_1 = arith.constant 0 : index
    %c0_2 = arith.constant 0 : index
    %9 = vector.load %arg2[%c0_1, %c0_2] : memref<50x32xbf16, #tpu.memory_space<vmem>>, vector<50x32xbf16>
    %cst = arith.constant dense<0.000000e+00> : vector<128x32xf32>
    %10 = tpu.matmul %8, %9, %cst {dimension_numbers = #tpu.dot_dimension_numbers<[1], [0], [0], [1], [0, 0, 1, 1], [], []>} : vector<128x50xbf16>, vector<50x32xbf16>, vector<128x32xf32> -> vector<128x32xf32>
    %11 = arith.truncf %10 : vector<128x32xf32> to vector<128x32xbf16>
    %c0_3 = arith.constant 0 : index
    %c0_4 = arith.constant 0 : index
    %12 = vector.load %arg3[%c0_3, %c0_4] : memref<32x128xbf16, #tpu.memory_space<vmem>>, vector<32x128xbf16>
    %cst_5 = arith.constant dense<0.000000e+00> : vector<128x128xf32>
    %13 = tpu.matmul %11, %12, %cst_5 {dimension_numbers = #tpu.dot_dimension_numbers<[1], [0], [0], [1], [0, 0, 1, 1], [], []>} : vector<128x32xbf16>, vector<32x128xbf16>, vector<128x128xf32> -> vector<128x128xf32>
    %14 = vector.shape_cast %13 : vector<128x128xf32> to vector<8x16x128xf32>
    %c0_6 = arith.constant 0 : index
    %c0_7 = arith.constant 0 : index
    %15 = vector.load %arg4[%c0_6, %c0_7] : memref<1x128xf32, #tpu.memory_space<vmem>>, vector<1x128xf32>
    %16 = vector.shape_cast %15 : vector<1x128xf32> to vector<1x1x128xf32>
    %17 = vector.broadcast %16 : vector<1x1x128xf32> to vector<8x16x128xf32>
    %18 = arith.addf %14, %17 : vector<8x16x128xf32>
    %19 = vector.extract_strided_slice %18 {offsets = [0, 0, 0], sizes = [8, 15, 8], strides = [1, 1, 1]} : vector<8x16x128xf32> to vector<8x15x8xf32>
    %20 = vector.extract_strided_slice %18 {offsets = [0, 1, 8], sizes = [8, 15, 8], strides = [1, 1, 1]} : vector<8x16x128xf32> to vector<8x15x8xf32>
    %21 = arith.addf %19, %20 : vector<8x15x8xf32>
    %cst_8 = arith.constant 0.000000e+00 : f32
    %22 = vector.broadcast %cst_8 : f32 to vector<8x15x8xf32>
    %23 = arith.maximumf %21, %22 : vector<8x15x8xf32>
    %cst_9 = arith.constant dense<0xFF800000> : vector<8x8xf32>
    %24 = vector.multi_reduction <maximumf>, %23, %cst_9 [1] : vector<8x15x8xf32> to vector<8x8xf32>
    %25 = vector.extract_strided_slice %18 {offsets = [0, 0, 16], sizes = [8, 14, 8], strides = [1, 1, 1]} : vector<8x16x128xf32> to vector<8x14x8xf32>
    %26 = vector.extract_strided_slice %18 {offsets = [0, 1, 24], sizes = [8, 14, 8], strides = [1, 1, 1]} : vector<8x16x128xf32> to vector<8x14x8xf32>
    %27 = arith.addf %25, %26 : vector<8x14x8xf32>
    %28 = vector.extract_strided_slice %18 {offsets = [0, 2, 32], sizes = [8, 14, 8], strides = [1, 1, 1]} : vector<8x16x128xf32> to vector<8x14x8xf32>
    %29 = arith.addf %27, %28 : vector<8x14x8xf32>
    %cst_10 = arith.constant 0.000000e+00 : f32
    %30 = vector.broadcast %cst_10 : f32 to vector<8x14x8xf32>
    %31 = arith.maximumf %29, %30 : vector<8x14x8xf32>
    %cst_11 = arith.constant dense<0xFF800000> : vector<8x8xf32>
    %32 = vector.multi_reduction <maximumf>, %31, %cst_11 [1] : vector<8x14x8xf32> to vector<8x8xf32>
    %33 = vector.extract_strided_slice %18 {offsets = [0, 0, 40], sizes = [8, 13, 8], strides = [1, 1, 1]} : vector<8x16x128xf32> to vector<8x13x8xf32>
    %34 = vector.extract_strided_slice %18 {offsets = [0, 1, 48], sizes = [8, 13, 8], strides = [1, 1, 1]} : vector<8x16x128xf32> to vector<8x13x8xf32>
    %35 = arith.addf %33, %34 : vector<8x13x8xf32>
    %36 = vector.extract_strided_slice %18 {offsets = [0, 2, 56], sizes = [8, 13, 8], strides = [1, 1, 1]} : vector<8x16x128xf32> to vector<8x13x8xf32>
    %37 = arith.addf %35, %36 : vector<8x13x8xf32>
    %38 = vector.extract_strided_slice %18 {offsets = [0, 3, 64], sizes = [8, 13, 8], strides = [1, 1, 1]} : vector<8x16x128xf32> to vector<8x13x8xf32>
    %39 = arith.addf %37, %38 : vector<8x13x8xf32>
    %cst_12 = arith.constant 0.000000e+00 : f32
    %40 = vector.broadcast %cst_12 : f32 to vector<8x13x8xf32>
    %41 = arith.maximumf %39, %40 : vector<8x13x8xf32>
    %cst_13 = arith.constant dense<0xFF800000> : vector<8x8xf32>
    %42 = vector.multi_reduction <maximumf>, %41, %cst_13 [1] : vector<8x13x8xf32> to vector<8x8xf32>
    %43 = tpu.concatenate %24, %32, %42 in 1 : vector<8x8xf32>, vector<8x8xf32>, vector<8x8xf32> -> vector<8x24xf32>
    %c0_14 = arith.constant 0 : index
    %c0_15 = arith.constant 0 : index
    %44 = vector.load %arg5[%c0_14, %c0_15] : memref<24x128xf32, #tpu.memory_space<vmem>>, vector<24x128xf32>
    %cst_16 = arith.constant dense<0.000000e+00> : vector<8x128xf32>
    %45 = tpu.matmul %43, %44, %cst_16 {dimension_numbers = #tpu.dot_dimension_numbers<[1], [0], [0], [1], [0, 0, 1, 1], [], []>} : vector<8x24xf32>, vector<24x128xf32>, vector<8x128xf32> -> vector<8x128xf32>
    %c0_17 = arith.constant 0 : index
    %c0_18 = arith.constant 0 : index
    %46 = vector.load %arg6[%c0_17, %c0_18] : memref<1x128xf32, #tpu.memory_space<vmem>>, vector<1x128xf32>
    %47 = vector.broadcast %46 : vector<1x128xf32> to vector<8x128xf32>
    %48 = arith.addf %45, %47 : vector<8x128xf32>
    %c0_19 = arith.constant 0 : index
    %c0_20 = arith.constant 0 : index
    %49 = vector.load %arg7[%c0_19, %c0_20] : memref<8x128xf32, #tpu.memory_space<vmem>>, vector<8x128xf32>
    tpu.vector_store %arg7[%c0_19, %c0_20], %48 {strides = array<i32>} : memref<8x128xf32, #tpu.memory_space<vmem>>, vector<8x128xf32>,
    return
  }
  func.func @transform_0(%arg0: i32) -> (i32, i32) {
    %c0_i32 = arith.constant 0 : i32
    %c0_i32_0 = arith.constant 0 : i32
    return %arg0, %c0_i32 : i32, i32
  }
  func.func @transform_1(%arg0: i32) -> (i32, i32) {
    %c0_i32 = arith.constant 0 : i32
    %c0_i32_0 = arith.constant 0 : i32
    %c0_i32_1 = arith.constant 0 : i32
    return %c0_i32, %c0_i32_0 : i32, i32
  }
  func.func @transform_2(%arg0: i32) -> (i32, i32) {
    %c0_i32 = arith.constant 0 : i32
    %c0_i32_0 = arith.constant 0 : i32
    %c0_i32_1 = arith.constant 0 : i32
    return %c0_i32, %c0_i32_0 : i32, i32
  }
  func.func @transform_3(%arg0: i32) -> (i32, i32) {
    %c0_i32 = arith.constant 0 : i32
    %c0_i32_0 = arith.constant 0 : i32
    %c0_i32_1 = arith.constant 0 : i32
    return %c0_i32, %c0_i32_0 : i32, i32
  }
  func.func @transform_4(%arg0: i32) -> (i32, i32) {
    %c0_i32 = arith.constant 0 : i32
    %c0_i32_0 = arith.constant 0 : i32
    %c0_i32_1 = arith.constant 0 : i32
    return %c0_i32, %c0_i32_0 : i32, i32
  }
  func.func @transform_5(%arg0: i32) -> (i32, i32) {
    %c0_i32 = arith.constant 0 : i32
    %c0_i32_0 = arith.constant 0 : i32
    %c0_i32_1 = arith.constant 0 : i32
    return %c0_i32, %c0_i32_0 : i32, i32
  }
  func.func @transform_6(%arg0: i32) -> (i32, i32) {
    %c0_i32 = arith.constant 0 : i32
    %c0_i32_0 = arith.constant 0 : i32
    return %arg0, %c0_i32 : i32, i32
  }
}

</mosaic_0001>

<llo_original>
// kernel: tpu_custom_call.1
$region0: #{tpu_custom_call.1}
  #allocation0 [shape = 'u32[]', space=smem, size = 0x4, offset = 0x4, fixed_abs, tag = 'smem constant byte address 0x4 - core index']
  #allocation1 [shape = 'u32[72,128]{1,0:T(1,128)}', space=vmem, size = 0x9000, scoped, tag = 'internal scratch']
  %s0 = inlined_call_operand.vmem [shape: s32[32,16], index: 0, kind: input, shape index: {}]
  %s1 = inlined_call_operand.vmem [shape: bf16[50,32], index: 1, kind: input, shape index: {}]
  %s2 = inlined_call_operand.vmem [shape: bf16[32,128], index: 2, kind: input, shape index: {}]
  %s3 = inlined_call_operand.vmem [shape: f32[1,128], index: 3, kind: input, shape index: {}]
  %s4 = inlined_call_operand.vmem [shape: f32[24,128], index: 4, kind: input, shape index: {}]
  %s5 = inlined_call_operand.vmem [shape: f32[1,128], index: 5, kind: input, shape index: {}]
  %s6 = inlined_call_operand.hbm [shape: f32[32,128], index: 6, kind: output, shape index: {}]
  %s7 = sld [smem:[#allocation0]]
  $region57: #{tpu_custom_call.1} parent=0
    _
  %s9 = ssub.s32 1, %s7
  %s10 = scalar_select 0, %s9, %s7
  $region1: #{tpu_custom_call.1} parent=0
    #allocation2 [shape = 'u8[8192]{0}', space=vmem, size = 0x2000, scoped, tag = 'output window, operand 0']
    #allocation3 [shape = 's32[2]{0}', space=sflag, size = 0x8, scoped, tag = 'scoped memory for tpu_custom_call.1']
    %11 = vsyncpa [#allocation3], 0
    %s12 = scalar_lea.sflag [#allocation3], 1
    %13 = vsyncpa %s12, 0
    loop: start=0, step=1, limit=6
    $region2: #{tpu_custom_call.1} parent=1 // loop_pre_header
      _
    $region3: #{tpu_custom_call.1} parent=1 // loop_header
      %s15 = sphi 0, %s19
      %p16 = scmp.ge.s32.totalorder %s15, 6
      %s25 = sphi 0, %s27
      %s28 = sphi 0, %s25
      %s29 = sphi 0, %s28
      %s45 = sphi 0, %s29
      %s49 = sphi 0, %s49
      %s51 = sphi 0, %s49
      %s52 = sphi 0, %s51
      %s66 = sphi 0, %s52
      %s70 = sphi 0, %s70
      %s72 = sphi 0, %s70
      %s73 = sphi 0, %s72
      %s87 = sphi 0, %s73
      %s91 = sphi 0, %s91
      %s93 = sphi 0, %s91
      %s94 = sphi 0, %s93
      %s108 = sphi 0, %s94
      %s112 = sphi 0, %s112
      %s114 = sphi 0, %s112
      %s115 = sphi 0, %s114
      %s129 = sphi 0, %s115
      %s133 = sphi 0, %s133
      %s135 = sphi 0, %s133
      %s136 = sphi 0, %s135
      %s150 = sphi 0, %s136
      %s156 = sphi 0, %s158
      %s159 = sphi 0, %s156
      %s160 = sphi 0, %s159
      %s176 = sphi 0, %s160
    $region4: #{tpu_custom_call.1} parent=1 // loop_header_branch
      %18 = sbr.rel (%p16) target = $region8
    $region5: #{tpu_custom_call.1} parent=1 // loop_body
      %s20 = ssub.s32 %s15, 1
      %s21 = ssub.s32 %s15, 2
      %s22 = sadd.s32 %s15, 1
      %s23 = ssub.s32 %s15, %s22
      %p24 = scmp.eq.s32.totalorder %s23, 0
      %s26 = sadd.s32 %s25, 1
      %s27 = scalar_select %p24, %s25, %s26
      %p30 = pneg %p24
      %p31 = scmp.eq.s32.totalorder %s15, 3
      %p32 = por %p30, %p31
      %p33 = scmp.ne.s32.totalorder %s25, %s28
      %p34 = scmp.eq.s32.totalorder %s15, 0
      %p35 = por %p33, %p34
      %p36 = scmp.ne.s32.totalorder %s25, %s28
      %p37 = scmp.eq.s32.totalorder %s20, 3
      %p38 = por %p36, %p37
      %p39 = scmp.ne.s32.totalorder %s28, %s29
      %p40 = scmp.eq.s32.totalorder %s20, 0
      %p41 = por %p39, %p40
      %p42 = scmp.ne.s32.totalorder %s28, %s29
      %p43 = scmp.eq.s32.totalorder %s21, 3
      %p44 = por %p42, %p43
      %p46 = scmp.ne.s32.totalorder %s29, %s45
      %p47 = scmp.eq.s32.totalorder %s21, 0
      %p48 = por %p46, %p47
      %s50 = sadd.s32 %s49, 1
      %p53 = scmp.eq.s32.totalorder %s15, 3
      %p54 = scmp.ne.s32.totalorder %s49, %s51
      %p55 = scmp.eq.s32.totalorder %s15, 0
      %p56 = por %p54, %p55
      %p57 = scmp.ne.s32.totalorder %s49, %s51
      %p58 = scmp.eq.s32.totalorder %s20, 3
      %p59 = por %p57, %p58
      %p60 = scmp.ne.s32.totalorder %s51, %s52
      %p61 = scmp.eq.s32.totalorder %s20, 0
      %p62 = por %p60, %p61
      %p63 = scmp.ne.s32.totalorder %s51, %s52
      %p64 = scmp.eq.s32.totalorder %s21, 3
      %p65 = por %p63, %p64
      %p67 = scmp.ne.s32.totalorder %s52, %s66
      %p68 = scmp.eq.s32.totalorder %s21, 0
      %p69 = por %p67, %p68
      %s71 = sadd.s32 %s70, 1
      %p74 = scmp.eq.s32.totalorder %s15, 3
      %p75 = scmp.ne.s32.totalorder %s70, %s72
      %p76 = scmp.eq.s32.totalorder %s15, 0
      %p77 = por %p75, %p76
      %p78 = scmp.ne.s32.totalorder %s70, %s72
      %p79 = scmp.eq.s32.totalorder %s20, 3
      %p80 = por %p78, %p79
      %p81 = scmp.ne.s32.totalorder %s72, %s73
      %p82 = scmp.eq.s32.totalorder %s20, 0
      %p83 = por %p81, %p82
      %p84 = scmp.ne.s32.totalorder %s72, %s73
      %p85 = scmp.eq.s32.totalorder %s21, 3
      %p86 = por %p84, %p85
      %p88 = scmp.ne.s32.totalorder %s73, %s87
      %p89 = scmp.eq.s32.totalorder %s21, 0
      %p90 = por %p88, %p89
      %s92 = sadd.s32 %s91, 1
      %p95 = scmp.eq.s32.totalorder %s15, 3
      %p96 = scmp.ne.s32.totalorder %s91, %s93
      %p97 = scmp.eq.s32.totalorder %s15, 0
      %p98 = por %p96, %p97
      %p99 = scmp.ne.s32.totalorder %s91, %s93
      %p100 = scmp.eq.s32.totalorder %s20, 3
      %p101 = por %p99, %p100
      %p102 = scmp.ne.s32.totalorder %s93, %s94
      %p103 = scmp.eq.s32.totalorder %s20, 0
      %p104 = por %p102, %p103
      %p105 = scmp.ne.s32.totalorder %s93, %s94
      %p106 = scmp.eq.s32.totalorder %s21, 3
      %p107 = por %p105, %p106
      %p109 = scmp.ne.s32.totalorder %s94, %s108
      %p110 = scmp.eq.s32.totalorder %s21, 0
      %p111 = por %p109, %p110
      %s113 = sadd.s32 %s112, 1
      %p116 = scmp.eq.s32.totalorder %s15, 3
      %p117 = scmp.ne.s32.totalorder %s112, %s114
      %p118 = scmp.eq.s32.totalorder %s15, 0
      %p119 = por %p117, %p118
      %p120 = scmp.ne.s32.totalorder %s112, %s114
      %p121 = scmp.eq.s32.totalorder %s20, 3
      %p122 = por %p120, %p121
      %p123 = scmp.ne.s32.totalorder %s114, %s115
      %p124 = scmp.eq.s32.totalorder %s20, 0
      %p125 = por %p123, %p124
      %p126 = scmp.ne.s32.totalorder %s114, %s115
      %p127 = scmp.eq.s32.totalorder %s21, 3
      %p128 = por %p126, %p127
      %p130 = scmp.ne.s32.totalorder %s115, %s129
      %p131 = scmp.eq.s32.totalorder %s21, 0
      %p132 = por %p130, %p131
      %s134 = sadd.s32 %s133, 1
      %p137 = scmp.eq.s32.totalorder %s15, 3
      %p138 = scmp.ne.s32.totalorder %s133, %s135
      %p139 = scmp.eq.s32.totalorder %s15, 0
      %p140 = por %p138, %p139
      %p141 = scmp.ne.s32.totalorder %s133, %s135
      %p142 = scmp.eq.s32.totalorder %s20, 3
      %p143 = por %p141, %p142
      %p144 = scmp.ne.s32.totalorder %s135, %s136
      %p145 = scmp.eq.s32.totalorder %s20, 0
      %p146 = por %p144, %p145
      %p147 = scmp.ne.s32.totalorder %s135, %s136
      %p148 = scmp.eq.s32.totalorder %s21, 3
      %p149 = por %p147, %p148
      %p151 = scmp.ne.s32.totalorder %s136, %s150
      %p152 = scmp.eq.s32.totalorder %s21, 0
      %p153 = por %p151, %p152
      %s154 = ssub.s32 %s15, %s22
      %p155 = scmp.eq.s32.totalorder %s154, 0
      %s157 = sadd.s32 %s156, 1
      %s158 = scalar_select %p155, %s156, %s157
      %p161 = pneg %p155
      %p162 = scmp.eq.s32.totalorder %s15, 3
      %p163 = por %p161, %p162
      %p164 = scmp.ne.s32.totalorder %s156, %s159
      %p165 = scmp.eq.s32.totalorder %s15, 0
      %p166 = por %p164, %p165
      %p167 = scmp.ne.s32.totalorder %s156, %s159
      %p168 = scmp.eq.s32.totalorder %s20, 3
      %p169 = por %p167, %p168
      %p170 = scmp.ne.s32.totalorder %s159, %s160
      %p171 = scmp.eq.s32.totalorder %s20, 0
      %p172 = por %p170, %p171
      %p173 = scmp.ne.s32.totalorder %s159, %s160
      %p174 = scmp.eq.s32.totalorder %s21, 3
      %p175 = por %p173, %p174
      %p177 = scmp.ne.s32.totalorder %s160, %s176
      %p178 = scmp.eq.s32.totalorder %s21, 0
      %p179 = por %p177, %p178
      %p180 = scmp.le.s32.totalorder 1, %s15
      %p181 = scmp.lt.s32.totalorder %s15, 5
      %p182 = pnand %p180, %p181
      %p183 = pneg %p182
      // Predicated region
      $region9: #{tpu_custom_call.1} parent=5 // pred_check
        _
      $region10: #{tpu_custom_call.1} parent=5 // pred_check_branch
        %185 = sbr.rel (%p182) target = $region12
      $region11: #{tpu_custom_call.1} parent=5 // pred_region
        %s186 = ssub.s32 %s15, 1
        // Predicated region
        $region13: #{tpu_custom_call.1} parent=11 // pred_check
          %p187 = pneg %p62
        $region14: #{tpu_custom_call.1} parent=11 // pred_check_branch
          %189 = sbr.rel (%p187) target = $region16
        $region15: #{tpu_custom_call.1} parent=11 // pred_region
          _
        $region16: #{tpu_custom_call.1} parent=11 // pred_fallthru
          _
        // Predicated region
        $region17: #{tpu_custom_call.1} parent=11 // pred_check
          %p190 = pneg %p83
        $region18: #{tpu_custom_call.1} parent=11 // pred_check_branch
          %192 = sbr.rel (%p190) target = $region20
        $region19: #{tpu_custom_call.1} parent=11 // pred_region
          _
        $region20: #{tpu_custom_call.1} parent=11 // pred_fallthru
          _
        // Predicated region
        $region21: #{tpu_custom_call.1} parent=11 // pred_check
          %p193 = pneg %p104
        $region22: #{tpu_custom_call.1} parent=11 // pred_check_branch
          %195 = sbr.rel (%p193) target = $region24
        $region23: #{tpu_custom_call.1} parent=11 // pred_region
          _
        $region24: #{tpu_custom_call.1} parent=11 // pred_fallthru
          _
        // Predicated region
        $region25: #{tpu_custom_call.1} parent=11 // pred_check
          %p196 = pneg %p125
        $region26: #{tpu_custom_call.1} parent=11 // pred_check_branch
          %198 = sbr.rel (%p196) target = $region28
        $region27: #{tpu_custom_call.1} parent=11 // pred_region
          _
        $region28: #{tpu_custom_call.1} parent=11 // pred_fallthru
          _
        // Predicated region
        $region29: #{tpu_custom_call.1} parent=11 // pred_check
          %p199 = pneg %p146
        $region30: #{tpu_custom_call.1} parent=11 // pred_check_branch
          %201 = sbr.rel (%p199) target = $region32
        $region31: #{tpu_custom_call.1} parent=11 // pred_region
          _
        $region32: #{tpu_custom_call.1} parent=11 // pred_fallthru
          _
      $region12: #{tpu_custom_call.1} parent=5 // pred_fallthru
        _
      %p202 = scmp.lt.s32.totalorder %s15, 4
      // Predicated region
      $region33: #{tpu_custom_call.1} parent=5 // pred_check
        %p203 = pneg %p202
      $region34: #{tpu_custom_call.1} parent=5 // pred_check_branch
        %205 = sbr.rel (%p203) target = $region36
      $region35: #{tpu_custom_call.1} parent=5 // pred_region
        // Predicated region
        $region37: #{tpu_custom_call.1} parent=35 // pred_check
          %p206 = pneg %p35
        $region38: #{tpu_custom_call.1} parent=35 // pred_check_branch
          %208 = sbr.rel (%p206) target = $region40
        $region39: #{tpu_custom_call.1} parent=35 // pred_region
          %p209 = scmp.lt.s32.totalorder %s15, 3
          %s210 = scalar_select %p209, %s15, 3
          %s211 = smul.addr %s210, 8
          %s212 = scalar_lea.vmem %s0, %s211
        $region40: #{tpu_custom_call.1} parent=35 // pred_fallthru
          _
      $region36: #{tpu_custom_call.1} parent=5 // pred_fallthru
        _
      %p213 = scmp.le.s32.totalorder 1, %s15
      %p214 = scmp.lt.s32.totalorder %s15, 5
      %p215 = pnand %p213, %p214
      %p216 = pneg %p215
      // Predicated region
      $region41: #{tpu_custom_call.1} parent=5 // pred_check
        _
      $region42: #{tpu_custom_call.1} parent=5 // pred_check_branch
        %218 = sbr.rel (%p215) target = $region44
      $region43: #{tpu_custom_call.1} parent=5 // pred_region
        %s219 = ssub.s32 %s15, 1
        %p220 = scmp.lt.s32.totalorder %s20, 3
        %s221 = scalar_select %p220, %s20, 3
        %s222 = smul.addr %s221, 8
        %s223 = scalar_lea.vmem %s0, %s222
        %p224 = pneg %p41
        %p225 = pneg %p38
        %p226 = pneg %p62
        %p227 = pneg %p59
        %p228 = pneg %p83
        %p229 = pneg %p80
        %p230 = pneg %p104
        %p231 = pneg %p101
        %p232 = pneg %p125
        %p233 = pneg %p122
        %p234 = pneg %p146
        %p235 = pneg %p143
        %p236 = pneg %p172
        %p237 = pneg %p169
        %s238 = sand.u32 %s159, 1
        %s239 = scalar_lea.sflag [#allocation3], %s238
        %s240 = sand.u32 %s159, 1
        %s241 = smul.addr %s240, 8
        %s242 = scalar_lea.vmem [#allocation2], %s241
        %p243 = scmp.lt.s32.totalorder %s20, 3
        %s244 = scalar_select %p243, %s20, 3
        %s245 = smul.addr %s244, 8
        %s246 = scalar_lea.vmem %s0, %s245
        %v248 = vld [vmem:[%s246] sm:$0xff]
        %v249 = vlaneseq
        %v250 = vand.u32 %v249, 127
        %v251 = vperm.slane %v248, 0
        %v252 = vlaneseq
        %v253 = vshrl.u32 %v252, 7
        %255 = vset.pattern.permute.xlu0 %v253
        %256 = vperm.xlu0 %255, %v251
        %v257 = vpop.permute.xlu0 %256
        %v258 = vlaneseq
        %v259 = vshrl.u32 %v258, 7
        %v260 = vadd.s32 %v259, 8
        %261 = vset.pattern.permute.xlu0 %v260
        %262 = vperm.xlu0 %261, %v251
        %v263 = vpop.permute.xlu0 %262
        %v264 = vperm.slane %v248, 1
        %v265 = vlaneseq
        %v266 = vshrl.u32 %v265, 7
        %268 = vset.pattern.permute.xlu0 %v266
        %269 = vperm.xlu0 %268, %v264
        %v270 = vpop.permute.xlu0 %269
        %v271 = vlaneseq
        %v272 = vshrl.u32 %v271, 7
        %v273 = vadd.s32 %v272, 8
        %274 = vset.pattern.permute.xlu0 %v273
        %275 = vperm.xlu0 %274, %v264
        %v276 = vpop.permute.xlu0 %275
        %v277 = vperm.slane %v248, 2
        %v278 = vlaneseq
        %v279 = vshrl.u32 %v278, 7
        %281 = vset.pattern.permute.xlu0 %v279
        %282 = vperm.xlu0 %281, %v277
        %v283 = vpop.permute.xlu0 %282
        %v284 = vlaneseq
        %v285 = vshrl.u32 %v284, 7
        %v286 = vadd.s32 %v285, 8
        %287 = vset.pattern.permute.xlu0 %v286
        %288 = vperm.xlu0 %287, %v277
        %v289 = vpop.permute.xlu0 %288
        %v290 = vperm.slane %v248, 3
        %v291 = vlaneseq
        %v292 = vshrl.u32 %v291, 7
        %294 = vset.pattern.permute.xlu0 %v292
        %295 = vperm.xlu0 %294, %v290
        %v296 = vpop.permute.xlu0 %295
        %v297 = vlaneseq
        %v298 = vshrl.u32 %v297, 7
        %v299 = vadd.s32 %v298, 8
        %300 = vset.pattern.permute.xlu0 %v299
        %301 = vperm.xlu0 %300, %v290
        %v302 = vpop.permute.xlu0 %301
        %v303 = vperm.slane %v248, 4
        %v304 = vlaneseq
        %v305 = vshrl.u32 %v304, 7
        %307 = vset.pattern.permute.xlu0 %v305
        %308 = vperm.xlu0 %307, %v303
        %v309 = vpop.permute.xlu0 %308
        %v310 = vlaneseq
        %v311 = vshrl.u32 %v310, 7
        %v312 = vadd.s32 %v311, 8
        %313 = vset.pattern.permute.xlu0 %v312
        %314 = vperm.xlu0 %313, %v303
        %v315 = vpop.permute.xlu0 %314
        %v316 = vperm.slane %v248, 5
        %v317 = vlaneseq
        %v318 = vshrl.u32 %v317, 7
        %320 = vset.pattern.permute.xlu0 %v318
        %321 = vperm.xlu0 %320, %v316
        %v322 = vpop.permute.xlu0 %321
        %v323 = vlaneseq
        %v324 = vshrl.u32 %v323, 7
        %v325 = vadd.s32 %v324, 8
        %326 = vset.pattern.permute.xlu0 %v325
        %327 = vperm.xlu0 %326, %v316
        %v328 = vpop.permute.xlu0 %327
        %v329 = vperm.slane %v248, 6
        %v330 = vlaneseq
        %v331 = vshrl.u32 %v330, 7
        %333 = vset.pattern.permute.xlu0 %v331
        %334 = vperm.xlu0 %333, %v329
        %v335 = vpop.permute.xlu0 %334
        %v336 = vlaneseq
        %v337 = vshrl.u32 %v336, 7
        %v338 = vadd.s32 %v337, 8
        %339 = vset.pattern.permute.xlu0 %v338
        %340 = vperm.xlu0 %339, %v329
        %v341 = vpop.permute.xlu0 %340
        %v342 = vperm.slane %v248, 7
        %v343 = vlaneseq
        %v344 = vshrl.u32 %v343, 7
        %346 = vset.pattern.permute.xlu0 %v344
        %347 = vperm.xlu0 %346, %v342
        %v348 = vpop.permute.xlu0 %347
        %v349 = vlaneseq
        %v350 = vshrl.u32 %v349, 7
        %v351 = vadd.s32 %v350, 8
        %352 = vset.pattern.permute.xlu0 %v351
        %353 = vperm.xlu0 %352, %v342
        %v354 = vpop.permute.xlu0 %353
        %vm355 = vcmp.eq.s32.totalorder %v250, %v257
        %vm356 = vcmp.eq.s32.totalorder %v250, %v263
        %vm357 = vcmp.eq.s32.totalorder %v250, %v270
        %vm358 = vcmp.eq.s32.totalorder %v250, %v276
        %vm359 = vcmp.eq.s32.totalorder %v250, %v283
        %vm360 = vcmp.eq.s32.totalorder %v250, %v289
        %vm361 = vcmp.eq.s32.totalorder %v250, %v296
        %vm362 = vcmp.eq.s32.totalorder %v250, %v302
        %vm363 = vcmp.eq.s32.totalorder %v250, %v309
        %vm364 = vcmp.eq.s32.totalorder %v250, %v315
        %vm365 = vcmp.eq.s32.totalorder %v250, %v322
        %vm366 = vcmp.eq.s32.totalorder %v250, %v328
        %vm367 = vcmp.eq.s32.totalorder %v250, %v335
        %vm368 = vcmp.eq.s32.totalorder %v250, %v341
        %vm369 = vcmp.eq.s32.totalorder %v250, %v348
        %vm370 = vcmp.eq.s32.totalorder %v250, %v354
        %v371 = vsel %vm355, 1, 0
        %v372 = vsel %vm356, 1, 0
        %v373 = vsel %vm357, 1, 0
        %v374 = vsel %vm358, 1, 0
        %v375 = vsel %vm359, 1, 0
        %v376 = vsel %vm360, 1, 0
        %v377 = vsel %vm361, 1, 0
        %v378 = vsel %vm362, 1, 0
        %v379 = vsel %vm363, 1, 0
        %v380 = vsel %vm364, 1, 0
        %v381 = vsel %vm365, 1, 0
        %v382 = vsel %vm366, 1, 0
        %v383 = vsel %vm367, 1, 0
        %v384 = vsel %vm368, 1, 0
        %v385 = vsel %vm369, 1, 0
        %v386 = vsel %vm370, 1, 0
        %v387 = vcvt.s32.f32 %v371
        %v388 = vcvt.s32.f32 %v372
        %v389 = vcvt.s32.f32 %v373
        %v390 = vcvt.s32.f32 %v374
        %v391 = vcvt.s32.f32 %v375
        %v392 = vcvt.s32.f32 %v376
        %v393 = vcvt.s32.f32 %v377
        %v394 = vcvt.s32.f32 %v378
        %v395 = vcvt.s32.f32 %v379
        %v396 = vcvt.s32.f32 %v380
        %v397 = vcvt.s32.f32 %v381
        %v398 = vcvt.s32.f32 %v382
        %v399 = vcvt.s32.f32 %v383
        %v400 = vcvt.s32.f32 %v384
        %v401 = vcvt.s32.f32 %v385
        %v402 = vcvt.s32.f32 %v386
        %v403 = vpack.c.bf16 %v387, %v387
        %v404 = vpack.c.bf16 %v388, %v388
        %v405 = vpack.c.bf16 %v389, %v389
        %v406 = vpack.c.bf16 %v390, %v390
        %v407 = vpack.c.bf16 %v391, %v391
        %v408 = vpack.c.bf16 %v392, %v392
        %v409 = vpack.c.bf16 %v393, %v393
        %v410 = vpack.c.bf16 %v394, %v394
        %v411 = vpack.c.bf16 %v395, %v395
        %v412 = vpack.c.bf16 %v396, %v396
        %v413 = vpack.c.bf16 %v397, %v397
        %v414 = vpack.c.bf16 %v398, %v398
        %v415 = vpack.c.bf16 %v399, %v399
        %v416 = vpack.c.bf16 %v400, %v400
        %v417 = vpack.c.bf16 %v401, %v401
        %v418 = vpack.c.bf16 %v402, %v402
        %v419 = vld [vmem:[%s1] sm:$0xf]
        %v420 = vld [vmem:[%s1 + $0x4] sm:$0xf]
        %v421 = vld [vmem:[%s1 + $0x8] sm:$0xf]
        %v422 = vld [vmem:[%s1 + $0xc] sm:$0xf]
        %v423 = vld [vmem:[%s1 + $0x10] sm:$0xf]
        %v424 = vld [vmem:[%s1 + $0x14] sm:$0xf]
        %v425 = vld [vmem:[%s1 + $0x18] sm:$0x1]
        %v442 = vunpack.c.l.b16 %v403
        %v443 = vunpack.c.l.b16 %v404
        %v444 = vunpack.c.l.b16 %v405
        %v445 = vunpack.c.l.b16 %v406
        %v446 = vunpack.c.l.b16 %v407
        %v447 = vunpack.c.l.b16 %v408
        %v448 = vunpack.c.l.b16 %v409
        %v449 = vunpack.c.l.b16 %v410
        %v450 = vunpack.c.l.b16 %v411
        %v451 = vunpack.c.l.b16 %v412
        %v452 = vunpack.c.l.b16 %v413
        %v453 = vunpack.c.l.b16 %v414
        %v454 = vunpack.c.l.b16 %v415
        %v455 = vunpack.c.l.b16 %v416
        %v456 = vunpack.c.l.b16 %v417
        %v457 = vunpack.c.l.b16 %v418
        %v458 = vpack.c.b16 %v443, %v442
        %v459 = vpack.c.b16 %v445, %v444
        %v460 = vpack.c.b16 %v447, %v446
        %v461 = vpack.c.b16 %v449, %v448
        %v462 = vpack.c.b16 %v451, %v450
        %v463 = vpack.c.b16 %v453, %v452
        %v464 = vpack.c.b16 %v455, %v454
        %v465 = vpack.c.b16 %v457, %v456
        %v473 = vunpack.c.l.b16 %v419
        %v474 = vunpack.c.l.b16 %v420
        %v475 = vunpack.c.l.b16 %v421
        %v476 = vunpack.c.l.b16 %v422
        %v477 = vunpack.c.l.b16 %v423
        %v478 = vunpack.c.l.b16 %v424
        %v479 = vunpack.c.l.b16 %v425
        %v480 = vpack.c.b16 %v474, %v473
        %v481 = vpack.c.b16 %v476, %v475
        %v482 = vpack.c.b16 %v478, %v477
        %v483 = vpack.c.b16 %v479, %v479
        %vm487 = vcmask 408576
        %v489 = vsel %vm487, %v458, 0
        %v492 = vsel %vm487, %v459, 0
        %v495 = vsel %vm487, %v460, 0
        %v498 = vsel %vm487, %v461, 0
        %v501 = vsel %vm487, %v462, 0
        %v504 = vsel %vm487, %v463, 0
        %v507 = vsel %vm487, %v464, 0
        %v510 = vsel %vm487, %v465, 0
        %vm512 = vcmask 1040384
        %v514 = vsel %vm512, %v483, 0
        %516 = vmatpush.bf16.msra.mxu0 0
        %517 = vmatpush.bf16.msra.mxu0 0
        %518 = vmatpush.bf16.msra.mxu0 0
        %519 = vmatpush.bf16.msra.mxu0 0
        %520 = vmatpush.bf16.msra.mxu0 %v514
        %521 = vmatpush.bf16.msra.mxu0 %v482
        %522 = vmatpush.bf16.msra.mxu0 %v481
        %523 = vmatpush.bf16.msra.mxu0 %v480
        %524 = vmatmul.bf16.gmra.mxu0 %v489
        %v525 = vpop.f32.mrf.mxu0
        %v526 = vadd.f32 0.0, %v525
        %v527 = vpop.f32.mrf.mxu0
        %v528 = vadd.f32 0.0, %v527
        %529 = vmatmul.bf16.gmra.mxu0 %v492
        %v530 = vpop.f32.mrf.mxu0
        %v531 = vadd.f32 0.0, %v530
        %v532 = vpop.f32.mrf.mxu0
        %v533 = vadd.f32 0.0, %v532
        %534 = vmatmul.bf16.gmra.mxu0 %v495
        %v535 = vpop.f32.mrf.mxu0
        %v536 = vadd.f32 0.0, %v535
        %v537 = vpop.f32.mrf.mxu0
        %v538 = vadd.f32 0.0, %v537
        %539 = vmatmul.bf16.gmra.mxu0 %v498
        %v540 = vpop.f32.mrf.mxu0
        %v541 = vadd.f32 0.0, %v540
        %v542 = vpop.f32.mrf.mxu0
        %v543 = vadd.f32 0.0, %v542
        %544 = vmatmul.bf16.gmra.mxu0 %v501
        %v545 = vpop.f32.mrf.mxu0
        %v546 = vadd.f32 0.0, %v545
        %v547 = vpop.f32.mrf.mxu0
        %v548 = vadd.f32 0.0, %v547
        %549 = vmatmul.bf16.gmra.mxu0 %v504
        %v550 = vpop.f32.mrf.mxu0
        %v551 = vadd.f32 0.0, %v550
        %v552 = vpop.f32.mrf.mxu0
        %v553 = vadd.f32 0.0, %v552
        %554 = vmatmul.bf16.gmra.mxu0 %v507
        %v555 = vpop.f32.mrf.mxu0
        %v556 = vadd.f32 0.0, %v555
        %v557 = vpop.f32.mrf.mxu0
        %v558 = vadd.f32 0.0, %v557
        %559 = vmatmul.bf16.gmra.mxu0 %v510
        %v560 = vpop.f32.mrf.mxu0
        %v561 = vadd.f32 0.0, %v560
        %v562 = vpop.f32.mrf.mxu0
        %v563 = vadd.f32 0.0, %v562
        %564 = vdwg.mxu0
        %v565 = vpack.c.bf16 %v528, %v526
        %v566 = vpack.c.bf16 %v533, %v531
        %v567 = vpack.c.bf16 %v538, %v536
        %v568 = vpack.c.bf16 %v543, %v541
        %v569 = vpack.c.bf16 %v548, %v546
        %v570 = vpack.c.bf16 %v553, %v551
        %v571 = vpack.c.bf16 %v558, %v556
        %v572 = vpack.c.bf16 %v563, %v561
        %v573 = vld [vmem:[%s2] sm:$0xf]
        %v574 = vld [vmem:[%s2 + $0x4] sm:$0xf]
        %v575 = vld [vmem:[%s2 + $0x8] sm:$0xf]
        %v576 = vld [vmem:[%s2 + $0xc] sm:$0xf]
        %v581 = vunpack.c.l.b16 %v573
        %v582 = vunpack.c.l.b16 %v574
        %v583 = vunpack.c.l.b16 %v575
        %v584 = vunpack.c.l.b16 %v576
        %v585 = vpack.c.b16 %v582, %v581
        %v586 = vpack.c.b16 %v584, %v583
        %vm589 = vcmask 261120
        %v591 = vsel %vm589, %v565, 0
        %v594 = vsel %vm589, %v566, 0
        %v597 = vsel %vm589, %v567, 0
        %v600 = vsel %vm589, %v568, 0
        %v603 = vsel %vm589, %v569, 0
        %v606 = vsel %vm589, %v570, 0
        %v609 = vsel %vm589, %v571, 0
        %v612 = vsel %vm589, %v572, 0
        %614 = vmatpush.bf16.msra.mxu0 0
        %615 = vmatpush.bf16.msra.mxu0 0
        %616 = vmatpush.bf16.msra.mxu0 0
        %617 = vmatpush.bf16.msra.mxu0 0
        %618 = vmatpush.bf16.msra.mxu0 0
        %619 = vmatpush.bf16.msra.mxu0 0
        %620 = vmatpush.bf16.msra.mxu0 %v586
        %621 = vmatpush.bf16.msra.mxu0 %v585
        %622 = vmatmul.bf16.gmra.mxu0 %v591
        %v623 = vpop.f32.mrf.mxu0
        %v624 = vadd.f32 0.0, %v623
        %v625 = vpop.f32.mrf.mxu0
        %v626 = vadd.f32 0.0, %v625
        %627 = vmatmul.bf16.gmra.mxu0 %v594
        %v628 = vpop.f32.mrf.mxu0
        %v629 = vadd.f32 0.0, %v628
        %v630 = vpop.f32.mrf.mxu0
        %v631 = vadd.f32 0.0, %v630
        %632 = vmatmul.bf16.gmra.mxu0 %v597
        %v633 = vpop.f32.mrf.mxu0
        %v634 = vadd.f32 0.0, %v633
        %v635 = vpop.f32.mrf.mxu0
        %v636 = vadd.f32 0.0, %v635
        %637 = vmatmul.bf16.gmra.mxu0 %v600
        %v638 = vpop.f32.mrf.mxu0
        %v639 = vadd.f32 0.0, %v638
        %v640 = vpop.f32.mrf.mxu0
        %v641 = vadd.f32 0.0, %v640
        %642 = vmatmul.bf16.gmra.mxu0 %v603
        %v643 = vpop.f32.mrf.mxu0
        %v644 = vadd.f32 0.0, %v643
        %v645 = vpop.f32.mrf.mxu0
        %v646 = vadd.f32 0.0, %v645
        %647 = vmatmul.bf16.gmra.mxu0 %v606
        %v648 = vpop.f32.mrf.mxu0
        %v649 = vadd.f32 0.0, %v648
        %v650 = vpop.f32.mrf.mxu0
        %v651 = vadd.f32 0.0, %v650
        %652 = vmatmul.bf16.gmra.mxu0 %v609
        %v653 = vpop.f32.mrf.mxu0
        %v654 = vadd.f32 0.0, %v653
        %v655 = vpop.f32.mrf.mxu0
        %v656 = vadd.f32 0.0, %v655
        %657 = vmatmul.bf16.gmra.mxu0 %v612
        %v658 = vpop.f32.mrf.mxu0
        %v659 = vadd.f32 0.0, %v658
        %v660 = vpop.f32.mrf.mxu0
        %v661 = vadd.f32 0.0, %v660
        %662 = vdwg.mxu0
        %v663 = vld [vmem:[%s3] sm:$0x1]
        %v665 = vperm.slane %v663, 0
        %v667 = vadd.f32 %v624, %v665
        %v668 = vadd.f32 %v626, %v665
        %v669 = vadd.f32 %v629, %v665
        %v670 = vadd.f32 %v631, %v665
        %v671 = vadd.f32 %v634, %v665
        %v672 = vadd.f32 %v636, %v665
        %v673 = vadd.f32 %v639, %v665
        %v674 = vadd.f32 %v641, %v665
        %v675 = vadd.f32 %v644, %v665
        %v676 = vadd.f32 %v646, %v665
        %v677 = vadd.f32 %v649, %v665
        %v678 = vadd.f32 %v651, %v665
        %v679 = vadd.f32 %v654, %v665
        %v680 = vadd.f32 %v656, %v665
        %v681 = vadd.f32 %v659, %v665
        %v682 = vadd.f32 %v661, %v665
        %vm699 = vcmask 1046528
        %v700 = vrot.slane %v667, 1
        %v701 = vrot.slane %v668, 1
        %v702 = vsel %vm699, %v700, %v701
        %v703 = vrot.slane %v669, 1
        %v704 = vrot.slane %v670, 1
        %v705 = vsel %vm699, %v703, %v704
        %v706 = vrot.slane %v671, 1
        %v707 = vrot.slane %v672, 1
        %v708 = vsel %vm699, %v706, %v707
        %v709 = vrot.slane %v673, 1
        %v710 = vrot.slane %v674, 1
        %v711 = vsel %vm699, %v709, %v710
        %v712 = vrot.slane %v675, 1
        %v713 = vrot.slane %v676, 1
        %v714 = vsel %vm699, %v712, %v713
        %v715 = vrot.slane %v677, 1
        %v716 = vrot.slane %v678, 1
        %v717 = vsel %vm699, %v715, %v716
        %v718 = vrot.slane %v679, 1
        %v719 = vrot.slane %v680, 1
        %v720 = vsel %vm699, %v718, %v719
        %v721 = vrot.slane %v681, 1
        %v722 = vrot.slane %v682, 1
        %v723 = vsel %vm699, %v721, %v722
        %724 = vrot.lane.b32.xlu0 %v702, 120
        %v725 = vpop.permute.xlu0 %724
        %726 = vrot.lane.b32.xlu0 %v701, 120
        %v727 = vpop.permute.xlu0 %726
        %728 = vrot.lane.b32.xlu0 %v705, 120
        %v729 = vpop.permute.xlu0 %728
        %730 = vrot.lane.b32.xlu0 %v704, 120
        %v731 = vpop.permute.xlu0 %730
        %732 = vrot.lane.b32.xlu0 %v708, 120
        %v733 = vpop.permute.xlu0 %732
        %734 = vrot.lane.b32.xlu0 %v707, 120
        %v735 = vpop.permute.xlu0 %734
        %736 = vrot.lane.b32.xlu0 %v711, 120
        %v737 = vpop.permute.xlu0 %736
        %738 = vrot.lane.b32.xlu0 %v710, 120
        %v739 = vpop.permute.xlu0 %738
        %740 = vrot.lane.b32.xlu0 %v714, 120
        %v741 = vpop.permute.xlu0 %740
        %742 = vrot.lane.b32.xlu0 %v713, 120
        %v743 = vpop.permute.xlu0 %742
        %744 = vrot.lane.b32.xlu0 %v717, 120
        %v745 = vpop.permute.xlu0 %744
        %746 = vrot.lane.b32.xlu0 %v716, 120
        %v747 = vpop.permute.xlu0 %746
        %748 = vrot.lane.b32.xlu0 %v720, 120
        %v749 = vpop.permute.xlu0 %748
        %750 = vrot.lane.b32.xlu0 %v719, 120
        %v751 = vpop.permute.xlu0 %750
        %752 = vrot.lane.b32.xlu0 %v723, 120
        %v753 = vpop.permute.xlu0 %752
        %754 = vrot.lane.b32.xlu0 %v722, 120
        %v755 = vpop.permute.xlu0 %754
        %v772 = vadd.f32 %v667, %v725
        %v773 = vadd.f32 %v668, %v727
        %v774 = vadd.f32 %v669, %v729
        %v775 = vadd.f32 %v670, %v731
        %v776 = vadd.f32 %v671, %v733
        %v777 = vadd.f32 %v672, %v735
        %v778 = vadd.f32 %v673, %v737
        %v779 = vadd.f32 %v674, %v739
        %v780 = vadd.f32 %v675, %v741
        %v781 = vadd.f32 %v676, %v743
        %v782 = vadd.f32 %v677, %v745
        %v783 = vadd.f32 %v678, %v747
        %v784 = vadd.f32 %v679, %v749
        %v785 = vadd.f32 %v680, %v751
        %v786 = vadd.f32 %v681, %v753
        %v787 = vadd.f32 %v682, %v755
        %v788 = vmax.f32 %v772, 0.0
        %v789 = vmax.f32 %v773, 0.0
        %v790 = vmax.f32 %v774, 0.0
        %v791 = vmax.f32 %v775, 0.0
        %v792 = vmax.f32 %v776, 0.0
        %v793 = vmax.f32 %v777, 0.0
        %v794 = vmax.f32 %v778, 0.0
        %v795 = vmax.f32 %v779, 0.0
        %v796 = vmax.f32 %v780, 0.0
        %v797 = vmax.f32 %v781, 0.0
        %v798 = vmax.f32 %v782, 0.0
        %v799 = vmax.f32 %v783, 0.0
        %v800 = vmax.f32 %v784, 0.0
        %v801 = vmax.f32 %v785, 0.0
        %v802 = vmax.f32 %v786, 0.0
        %v803 = vmax.f32 %v787, 0.0
        %vm804 = vcmask 64512
        %v805 = vsel %vm804, %v788, -inf
        %vm806 = vcmask 63488
        %v807 = vsel %vm806, %v789, -inf
        %v808 = vmax.f32 %v805, %v807
        %v809 = vrot.slane %v808, 4
        %v810 = vmax.f32 %v808, %v809
        %v811 = vrot.slane %v810, 2
        %v812 = vmax.f32 %v810, %v811
        %v813 = vrot.slane %v812, 1
        %v814 = vmax.f32 %v812, %v813
        %v815 = vsel %vm804, %v790, -inf
        %v816 = vsel %vm806, %v791, -inf
        %v817 = vmax.f32 %v815, %v816
        %v818 = vrot.slane %v817, 4
        %v819 = vmax.f32 %v817, %v818
        %v820 = vrot.slane %v819, 2
        %v821 = vmax.f32 %v819, %v820
        %v822 = vrot.slane %v821, 1
        %v823 = vmax.f32 %v821, %v822
        %v824 = vsel %vm804, %v792, -inf
        %v825 = vsel %vm806, %v793, -inf
        %v826 = vmax.f32 %v824, %v825
        %v827 = vrot.slane %v826, 4
        %v828 = vmax.f32 %v826, %v827
        %v829 = vrot.slane %v828, 2
        %v830 = vmax.f32 %v828, %v829
        %v831 = vrot.slane %v830, 1
        %v832 = vmax.f32 %v830, %v831
        %v833 = vsel %vm804, %v794, -inf
        %v834 = vsel %vm806, %v795, -inf
        %v835 = vmax.f32 %v833, %v834
        %v836 = vrot.slane %v835, 4
        %v837 = vmax.f32 %v835, %v836
        %v838 = vrot.slane %v837, 2
        %v839 = vmax.f32 %v837, %v838
        %v840 = vrot.slane %v839, 1
        %v841 = vmax.f32 %v839, %v840
        %v842 = vsel %vm804, %v796, -inf
        %v843 = vsel %vm806, %v797, -inf
        %v844 = vmax.f32 %v842, %v843
        %v845 = vrot.slane %v844, 4
        %v846 = vmax.f32 %v844, %v845
        %v847 = vrot.slane %v846, 2
        %v848 = vmax.f32 %v846, %v847
        %v849 = vrot.slane %v848, 1
        %v850 = vmax.f32 %v848, %v849
        %v851 = vsel %vm804, %v798, -inf
        %v852 = vsel %vm806, %v799, -inf
        %v853 = vmax.f32 %v851, %v852
        %v854 = vrot.slane %v853, 4
        %v855 = vmax.f32 %v853, %v854
        %v856 = vrot.slane %v855, 2
        %v857 = vmax.f32 %v855, %v856
        %v858 = vrot.slane %v857, 1
        %v859 = vmax.f32 %v857, %v858
        %v860 = vsel %vm804, %v800, -inf
        %v861 = vsel %vm806, %v801, -inf
        %v862 = vmax.f32 %v860, %v861
        %v863 = vrot.slane %v862, 4
        %v864 = vmax.f32 %v862, %v863
        %v865 = vrot.slane %v864, 2
        %v866 = vmax.f32 %v864, %v865
        %v867 = vrot.slane %v866, 1
        %v868 = vmax.f32 %v866, %v867
        %v869 = vsel %vm804, %v802, -inf
        %v870 = vsel %vm806, %v803, -inf
        %v871 = vmax.f32 %v869, %v870
        %v872 = vrot.slane %v871, 4
        %v873 = vmax.f32 %v871, %v872
        %v874 = vrot.slane %v873, 2
        %v875 = vmax.f32 %v873, %v874
        %v876 = vrot.slane %v875, 1
        %v877 = vmax.f32 %v875, %v876
        %vm878 = vcmask 1045504
        %v879 = vrot.slane %v667, 2
        %v880 = vrot.slane %v668, 2
        %v881 = vsel %vm878, %v879, %v880
        %v882 = vrot.slane %v669, 2
        %v883 = vrot.slane %v670, 2
        %v884 = vsel %vm878, %v882, %v883
        %v885 = vrot.slane %v671, 2
        %v886 = vrot.slane %v672, 2
        %v887 = vsel %vm878, %v885, %v886
        %v888 = vrot.slane %v673, 2
        %v889 = vrot.slane %v674, 2
        %v890 = vsel %vm878, %v888, %v889
        %v891 = vrot.slane %v675, 2
        %v892 = vrot.slane %v676, 2
        %v893 = vsel %vm878, %v891, %v892
        %v894 = vrot.slane %v677, 2
        %v895 = vrot.slane %v678, 2
        %v896 = vsel %vm878, %v894, %v895
        %v897 = vrot.slane %v679, 2
        %v898 = vrot.slane %v680, 2
        %v899 = vsel %vm878, %v897, %v898
        %v900 = vrot.slane %v681, 2
        %v901 = vrot.slane %v682, 2
        %v902 = vsel %vm878, %v900, %v901
        %903 = vrot.lane.b32.xlu0 %v881, 112
        %v904 = vpop.permute.xlu0 %903
        %905 = vrot.lane.b32.xlu0 %v880, 112
        %v906 = vpop.permute.xlu0 %905
        %907 = vrot.lane.b32.xlu0 %v884, 112
        %v908 = vpop.permute.xlu0 %907
        %909 = vrot.lane.b32.xlu0 %v883, 112
        %v910 = vpop.permute.xlu0 %909
        %911 = vrot.lane.b32.xlu0 %v887, 112
        %v912 = vpop.permute.xlu0 %911
        %913 = vrot.lane.b32.xlu0 %v886, 112
        %v914 = vpop.permute.xlu0 %913
        %915 = vrot.lane.b32.xlu0 %v890, 112
        %v916 = vpop.permute.xlu0 %915
        %917 = vrot.lane.b32.xlu0 %v889, 112
        %v918 = vpop.permute.xlu0 %917
        %919 = vrot.lane.b32.xlu0 %v893, 112
        %v920 = vpop.permute.xlu0 %919
        %921 = vrot.lane.b32.xlu0 %v892, 112
        %v922 = vpop.permute.xlu0 %921
        %923 = vrot.lane.b32.xlu0 %v896, 112
        %v924 = vpop.permute.xlu0 %923
        %925 = vrot.lane.b32.xlu0 %v895, 112
        %v926 = vpop.permute.xlu0 %925
        %927 = vrot.lane.b32.xlu0 %v899, 112
        %v928 = vpop.permute.xlu0 %927
        %929 = vrot.lane.b32.xlu0 %v898, 112
        %v930 = vpop.permute.xlu0 %929
        %931 = vrot.lane.b32.xlu0 %v902, 112
        %v932 = vpop.permute.xlu0 %931
        %933 = vrot.lane.b32.xlu0 %v901, 112
        %v934 = vpop.permute.xlu0 %933
        %v951 = vadd.f32 %v772, %v904
        %v952 = vadd.f32 %v773, %v906
        %v953 = vadd.f32 %v774, %v908
        %v954 = vadd.f32 %v775, %v910
        %v955 = vadd.f32 %v776, %v912
        %v956 = vadd.f32 %v777, %v914
        %v957 = vadd.f32 %v778, %v916
        %v958 = vadd.f32 %v779, %v918
        %v959 = vadd.f32 %v780, %v920
        %v960 = vadd.f32 %v781, %v922
        %v961 = vadd.f32 %v782, %v924
        %v962 = vadd.f32 %v783, %v926
        %v963 = vadd.f32 %v784, %v928
        %v964 = vadd.f32 %v785, %v930
        %v965 = vadd.f32 %v786, %v932
        %v966 = vadd.f32 %v787, %v934
        %v967 = vmax.f32 %v951, 0.0
        %v968 = vmax.f32 %v952, 0.0
        %v969 = vmax.f32 %v953, 0.0
        %v970 = vmax.f32 %v954, 0.0
        %v971 = vmax.f32 %v955, 0.0
        %v972 = vmax.f32 %v956, 0.0
        %v973 = vmax.f32 %v957, 0.0
        %v974 = vmax.f32 %v958, 0.0
        %v975 = vmax.f32 %v959, 0.0
        %v976 = vmax.f32 %v960, 0.0
        %v977 = vmax.f32 %v961, 0.0
        %v978 = vmax.f32 %v962, 0.0
        %v979 = vmax.f32 %v963, 0.0
        %v980 = vmax.f32 %v964, 0.0
        %v981 = vmax.f32 %v965, 0.0
        %v982 = vmax.f32 %v966, 0.0
        %vm983 = vcmask 195712
        %v984 = vsel %vm983, %v967, -inf
        %vm985 = vcmask 193664
        %v986 = vsel %vm985, %v968, -inf
        %v987 = vmax.f32 %v984, %v986
        %v988 = vrot.slane %v987, 4
        %v989 = vmax.f32 %v987, %v988
        %v990 = vrot.slane %v989, 2
        %v991 = vmax.f32 %v989, %v990
        %v992 = vrot.slane %v991, 1
        %v993 = vmax.f32 %v991, %v992
        %v994 = vsel %vm983, %v969, -inf
        %v995 = vsel %vm985, %v970, -inf
        %v996 = vmax.f32 %v994, %v995
        %v997 = vrot.slane %v996, 4
        %v998 = vmax.f32 %v996, %v997
        %v999 = vrot.slane %v998, 2
        %v1000 = vmax.f32 %v998, %v999
        %v1001 = vrot.slane %v1000, 1
        %v1002 = vmax.f32 %v1000, %v1001
        %v1003 = vsel %vm983, %v971, -inf
        %v1004 = vsel %vm985, %v972, -inf
        %v1005 = vmax.f32 %v1003, %v1004
        %v1006 = vrot.slane %v1005, 4
        %v1007 = vmax.f32 %v1005, %v1006
        %v1008 = vrot.slane %v1007, 2
        %v1009 = vmax.f32 %v1007, %v1008
        %v1010 = vrot.slane %v1009, 1
        %v1011 = vmax.f32 %v1009, %v1010
        %v1012 = vsel %vm983, %v973, -inf
        %v1013 = vsel %vm985, %v974, -inf
        %v1014 = vmax.f32 %v1012, %v1013
        %v1015 = vrot.slane %v1014, 4
        %v1016 = vmax.f32 %v1014, %v1015
        %v1017 = vrot.slane %v1016, 2
        %v1018 = vmax.f32 %v1016, %v1017
        %v1019 = vrot.slane %v1018, 1
        %v1020 = vmax.f32 %v1018, %v1019
        %v1021 = vsel %vm983, %v975, -inf
        %v1022 = vsel %vm985, %v976, -inf
        %v1023 = vmax.f32 %v1021, %v1022
        %v1024 = vrot.slane %v1023, 4
        %v1025 = vmax.f32 %v1023, %v1024
        %v1026 = vrot.slane %v1025, 2
        %v1027 = vmax.f32 %v1025, %v1026
        %v1028 = vrot.slane %v1027, 1
        %v1029 = vmax.f32 %v1027, %v1028
        %v1030 = vsel %vm983, %v977, -inf
        %v1031 = vsel %vm985, %v978, -inf
        %v1032 = vmax.f32 %v1030, %v1031
        %v1033 = vrot.slane %v1032, 4
        %v1034 = vmax.f32 %v1032, %v1033
        %v1035 = vrot.slane %v1034, 2
        %v1036 = vmax.f32 %v1034, %v1035
        %v1037 = vrot.slane %v1036, 1
        %v1038 = vmax.f32 %v1036, %v1037
        %v1039 = vsel %vm983, %v979, -inf
        %v1040 = vsel %vm985, %v980, -inf
        %v1041 = vmax.f32 %v1039, %v1040
        %v1042 = vrot.slane %v1041, 4
        %v1043 = vmax.f32 %v1041, %v1042
        %v1044 = vrot.slane %v1043, 2
        %v1045 = vmax.f32 %v1043, %v1044
        %v1046 = vrot.slane %v1045, 1
        %v1047 = vmax.f32 %v1045, %v1046
        %v1048 = vsel %vm983, %v981, -inf
        %v1049 = vsel %vm985, %v982, -inf
        %v1050 = vmax.f32 %v1048, %v1049
        %v1051 = vrot.slane %v1050, 4
        %v1052 = vmax.f32 %v1050, %v1051
        %v1053 = vrot.slane %v1052, 2
        %v1054 = vmax.f32 %v1052, %v1053
        %v1055 = vrot.slane %v1054, 1
        %v1056 = vmax.f32 %v1054, %v1055
        %vm1057 = vcmask 1044480
        %v1058 = vrot.slane %v667, 3
        %v1059 = vrot.slane %v668, 3
        %v1060 = vsel %vm1057, %v1058, %v1059
        %v1061 = vrot.slane %v669, 3
        %v1062 = vrot.slane %v670, 3
        %v1063 = vsel %vm1057, %v1061, %v1062
        %v1064 = vrot.slane %v671, 3
        %v1065 = vrot.slane %v672, 3
        %v1066 = vsel %vm1057, %v1064, %v1065
        %v1067 = vrot.slane %v673, 3
        %v1068 = vrot.slane %v674, 3
        %v1069 = vsel %vm1057, %v1067, %v1068
        %v1070 = vrot.slane %v675, 3
        %v1071 = vrot.slane %v676, 3
        %v1072 = vsel %vm1057, %v1070, %v1071
        %v1073 = vrot.slane %v677, 3
        %v1074 = vrot.slane %v678, 3
        %v1075 = vsel %vm1057, %v1073, %v1074
        %v1076 = vrot.slane %v679, 3
        %v1077 = vrot.slane %v680, 3
        %v1078 = vsel %vm1057, %v1076, %v1077
        %v1079 = vrot.slane %v681, 3
        %v1080 = vrot.slane %v682, 3
        %v1081 = vsel %vm1057, %v1079, %v1080
        %1082 = vrot.lane.b32.xlu0 %v1060, 104
        %v1083 = vpop.permute.xlu0 %1082
        %1084 = vrot.lane.b32.xlu0 %v1059, 104
        %v1085 = vpop.permute.xlu0 %1084
        %1086 = vrot.lane.b32.xlu0 %v1063, 104
        %v1087 = vpop.permute.xlu0 %1086
        %1088 = vrot.lane.b32.xlu0 %v1062, 104
        %v1089 = vpop.permute.xlu0 %1088
        %1090 = vrot.lane.b32.xlu0 %v1066, 104
        %v1091 = vpop.permute.xlu0 %1090
        %1092 = vrot.lane.b32.xlu0 %v1065, 104
        %v1093 = vpop.permute.xlu0 %1092
        %1094 = vrot.lane.b32.xlu0 %v1069, 104
        %v1095 = vpop.permute.xlu0 %1094
        %1096 = vrot.lane.b32.xlu0 %v1068, 104
        %v1097 = vpop.permute.xlu0 %1096
        %1098 = vrot.lane.b32.xlu0 %v1072, 104
        %v1099 = vpop.permute.xlu0 %1098
        %1100 = vrot.lane.b32.xlu0 %v1071, 104
        %v1101 = vpop.permute.xlu0 %1100
        %1102 = vrot.lane.b32.xlu0 %v1075, 104
        %v1103 = vpop.permute.xlu0 %1102
        %1104 = vrot.lane.b32.xlu0 %v1074, 104
        %v1105 = vpop.permute.xlu0 %1104
        %1106 = vrot.lane.b32.xlu0 %v1078, 104
        %v1107 = vpop.permute.xlu0 %1106
        %1108 = vrot.lane.b32.xlu0 %v1077, 104
        %v1109 = vpop.permute.xlu0 %1108
        %1110 = vrot.lane.b32.xlu0 %v1081, 104
        %v1111 = vpop.permute.xlu0 %1110
        %1112 = vrot.lane.b32.xlu0 %v1080, 104
        %v1113 = vpop.permute.xlu0 %1112
        %v1130 = vadd.f32 %v951, %v1083
        %v1131 = vadd.f32 %v952, %v1085
        %v1132 = vadd.f32 %v953, %v1087
        %v1133 = vadd.f32 %v954, %v1089
        %v1134 = vadd.f32 %v955, %v1091
        %v1135 = vadd.f32 %v956, %v1093
        %v1136 = vadd.f32 %v957, %v1095
        %v1137 = vadd.f32 %v958, %v1097
        %v1138 = vadd.f32 %v959, %v1099
        %v1139 = vadd.f32 %v960, %v1101
        %v1140 = vadd.f32 %v961, %v1103
        %v1141 = vadd.f32 %v962, %v1105
        %v1142 = vadd.f32 %v963, %v1107
        %v1143 = vadd.f32 %v964, %v1109
        %v1144 = vadd.f32 %v965, %v1111
        %v1145 = vadd.f32 %v966, %v1113
        %v1146 = vmax.f32 %v1130, 0.0
        %v1147 = vmax.f32 %v1131, 0.0
        %v1148 = vmax.f32 %v1132, 0.0
        %v1149 = vmax.f32 %v1133, 0.0
        %v1150 = vmax.f32 %v1134, 0.0
        %v1151 = vmax.f32 %v1135, 0.0
        %v1152 = vmax.f32 %v1136, 0.0
        %v1153 = vmax.f32 %v1137, 0.0
        %v1154 = vmax.f32 %v1138, 0.0
        %v1155 = vmax.f32 %v1139, 0.0
        %v1156 = vmax.f32 %v1140, 0.0
        %v1157 = vmax.f32 %v1141, 0.0
        %v1158 = vmax.f32 %v1142, 0.0
        %v1159 = vmax.f32 %v1143, 0.0
        %v1160 = vmax.f32 %v1144, 0.0
        %v1161 = vmax.f32 %v1145, 0.0
        %vm1162 = vcmask 392512
        %v1163 = vsel %vm1162, %v1146, -inf
        %vm1164 = vcmask 389440
        %v1165 = vsel %vm1164, %v1147, -inf
        %v1166 = vmax.f32 %v1163, %v1165
        %v1167 = vrot.slane %v1166, 4
        %v1168 = vmax.f32 %v1166, %v1167
        %v1169 = vrot.slane %v1168, 2
        %v1170 = vmax.f32 %v1168, %v1169
        %v1171 = vrot.slane %v1170, 1
        %v1172 = vmax.f32 %v1170, %v1171
        %v1173 = vsel %vm1162, %v1148, -inf
        %v1174 = vsel %vm1164, %v1149, -inf
        %v1175 = vmax.f32 %v1173, %v1174
        %v1176 = vrot.slane %v1175, 4
        %v1177 = vmax.f32 %v1175, %v1176
        %v1178 = vrot.slane %v1177, 2
        %v1179 = vmax.f32 %v1177, %v1178
        %v1180 = vrot.slane %v1179, 1
        %v1181 = vmax.f32 %v1179, %v1180
        %v1182 = vsel %vm1162, %v1150, -inf
        %v1183 = vsel %vm1164, %v1151, -inf
        %v1184 = vmax.f32 %v1182, %v1183
        %v1185 = vrot.slane %v1184, 4
        %v1186 = vmax.f32 %v1184, %v1185
        %v1187 = vrot.slane %v1186, 2
        %v1188 = vmax.f32 %v1186, %v1187
        %v1189 = vrot.slane %v1188, 1
        %v1190 = vmax.f32 %v1188, %v1189
        %v1191 = vsel %vm1162, %v1152, -inf
        %v1192 = vsel %vm1164, %v1153, -inf
        %v1193 = vmax.f32 %v1191, %v1192
        %v1194 = vrot.slane %v1193, 4
        %v1195 = vmax.f32 %v1193, %v1194
        %v1196 = vrot.slane %v1195, 2
        %v1197 = vmax.f32 %v1195, %v1196
        %v1198 = vrot.slane %v1197, 1
        %v1199 = vmax.f32 %v1197, %v1198
        %v1200 = vsel %vm1162, %v1154, -inf
        %v1201 = vsel %vm1164, %v1155, -inf
        %v1202 = vmax.f32 %v1200, %v1201
        %v1203 = vrot.slane %v1202, 4
        %v1204 = vmax.f32 %v1202, %v1203
        %v1205 = vrot.slane %v1204, 2
        %v1206 = vmax.f32 %v1204, %v1205
        %v1207 = vrot.slane %v1206, 1
        %v1208 = vmax.f32 %v1206, %v1207
        %v1209 = vsel %vm1162, %v1156, -inf
        %v1210 = vsel %vm1164, %v1157, -inf
        %v1211 = vmax.f32 %v1209, %v1210
        %v1212 = vrot.slane %v1211, 4
        %v1213 = vmax.f32 %v1211, %v1212
        %v1214 = vrot.slane %v1213, 2
        %v1215 = vmax.f32 %v1213, %v1214
        %v1216 = vrot.slane %v1215, 1
        %v1217 = vmax.f32 %v1215, %v1216
        %v1218 = vsel %vm1162, %v1158, -inf
        %v1219 = vsel %vm1164, %v1159, -inf
        %v1220 = vmax.f32 %v1218, %v1219
        %v1221 = vrot.slane %v1220, 4
        %v1222 = vmax.f32 %v1220, %v1221
        %v1223 = vrot.slane %v1222, 2
        %v1224 = vmax.f32 %v1222, %v1223
        %v1225 = vrot.slane %v1224, 1
        %v1226 = vmax.f32 %v1224, %v1225
        %v1227 = vsel %vm1162, %v1160, -inf
        %v1228 = vsel %vm1164, %v1161, -inf
        %v1229 = vmax.f32 %v1227, %v1228
        %v1230 = vrot.slane %v1229, 4
        %v1231 = vmax.f32 %v1229, %v1230
        %v1232 = vrot.slane %v1231, 2
        %v1233 = vmax.f32 %v1231, %v1232
        %v1234 = vrot.slane %v1233, 1
        %v1235 = vmax.f32 %v1233, %v1234
        %vm1244 = vcmask 1041409
        %v1245 = vsel %vm1244, %v823, %v814
        %vm1246 = vcmask 1042434
        %v1247 = vsel %vm1246, %v832, %v1245
        %vm1248 = vcmask 1043459
        %v1249 = vsel %vm1248, %v841, %v1247
        %vm1250 = vcmask 1044484
        %v1251 = vsel %vm1250, %v850, %v1249
        %vm1252 = vcmask 1045509
        %v1253 = vsel %vm1252, %v859, %v1251
        %vm1254 = vcmask 1046534
        %v1255 = vsel %vm1254, %v868, %v1253
        %vm1256 = vcmask 1047559
        %v1257 = vsel %vm1256, %v877, %v1255
        %v1267 = vsel %vm1244, %v1002, %v993
        %v1268 = vsel %vm1246, %v1011, %v1267
        %v1269 = vsel %vm1248, %v1020, %v1268
        %v1270 = vsel %vm1250, %v1029, %v1269
        %v1271 = vsel %vm1252, %v1038, %v1270
        %v1272 = vsel %vm1254, %v1047, %v1271
        %v1273 = vsel %vm1256, %v1056, %v1272
        %1274 = vrot.lane.b32.xlu0 %v1273, 120
        %v1275 = vpop.permute.xlu0 %1274
        %v1285 = vsel %vm1244, %v1181, %v1172
        %v1286 = vsel %vm1246, %v1190, %v1285
        %v1287 = vsel %vm1248, %v1199, %v1286
        %v1288 = vsel %vm1250, %v1208, %v1287
        %v1289 = vsel %vm1252, %v1217, %v1288
        %v1290 = vsel %vm1254, %v1226, %v1289
        %v1291 = vsel %vm1256, %v1235, %v1290
        %1292 = vrot.lane.b32.xlu0 %v1291, 104
        %v1293 = vpop.permute.xlu0 %1292
        %v1295 = vsel %vm804, %v1257, %v1275
        %vm1296 = vcmask 130048
        %v1297 = vsel %vm1296, %v1295, %v1293
        %v1298 = vld [vmem:[%s4] sm:$0xff]
        %v1299 = vld [vmem:[%s4 + $0x8] sm:$0xff]
        %v1300 = vld [vmem:[%s4 + $0x10] sm:$0xff]
        %v1301 = vld [vmem:[%s5] sm:$0x1]
        %v1303 = vperm.slane %v1301, 0
        %vm1305 = vcmask 195584
        %v1307 = vsel %vm1305, %v1297, 0
        %1309 = vmatpush.msra.mxu0 0.0
        %1310 = vmatpush.msra.mxu0 0.0
        %1311 = vmatpush.msra.mxu0 0.0
        %1312 = vmatpush.msra.mxu0 0.0
        %1313 = vmatpush.msra.mxu0 0.0
        %1314 = vmatpush.msra.mxu0 0.0
        %1315 = vmatpush.msra.mxu0 0.0
        %1316 = vmatpush.msra.mxu0 0.0
        %1317 = vmatpush.msra.mxu0 0.0
        %1318 = vmatpush.msra.mxu0 0.0
        %1319 = vmatpush.msra.mxu0 0.0
        %1320 = vmatpush.msra.mxu0 0.0
        %1321 = vmatpush.msra.mxu0 0.0
        %1322 = vmatpush.msra.mxu0 %v1300
        %1323 = vmatpush.msra.mxu0 %v1299
        %1324 = vmatpush.msra.mxu0 %v1298
        %1325 = vmatmul.f32.gmra.mxu0 %v1307
        %v1326 = vpop.f32.mrf.mxu0
        %v1327 = vadd.f32 %v1303, %v1326
        %1328 = vdwg.mxu0
        %1329 = vst [vmem:[%s242] sm:$0xff] %v1327
        %s1330 = sand.u32 %s159, 1
        %s1331 = scalar_lea.sflag [#allocation3], %s1330
        %s1332 = sand.u32 %s159, 1
        %s1333 = smul.addr %s1332, 8
        %s1334 = scalar_lea.vmem [#allocation2], %s1333
        // Predicated region
        $region45: #{tpu_custom_call.1} parent=43 // pred_check
          %p1335 = pneg %p169
        $region46: #{tpu_custom_call.1} parent=43 // pred_check_branch
          %1337 = sbr.rel (%p1335) target = $region48
        $region47: #{tpu_custom_call.1} parent=43 // pred_region
          %1339 = vsyncadd %s1331, 0
          %s1340 = smul.addr %s20, 8
          %s1341 = scalar_lea.hbm %s6, %s1340
          %s1343 = sshll.u32 %s1334, 4
          %s1344 = int_to_ptr.vmem [resolvable:$true] %s1343
          %s1345 = sshll.u32 %s1341, 4
          %s1346 = int_to_ptr.hbm [resolvable:$true] %s1345
          %1348 = dma.vmem_to_hbm [thread:$0]  %s1344, 128, %s1346, %s1331
        $region48: #{tpu_custom_call.1} parent=43 // pred_fallthru
          _
      $region44: #{tpu_custom_call.1} parent=5 // pred_fallthru
        _
      %p1349 = scmp.le.s32.totalorder 2, %s15
      // Predicated region
      $region49: #{tpu_custom_call.1} parent=5 // pred_check
        %p1350 = pneg %p1349
      $region50: #{tpu_custom_call.1} parent=5 // pred_check_branch
        %1352 = sbr.rel (%p1350) target = $region52
      $region51: #{tpu_custom_call.1} parent=5 // pred_region
        %s1353 = ssub.s32 %s15, 2
        // Predicated region
        $region53: #{tpu_custom_call.1} parent=51 // pred_check
          %p1354 = pneg %p175
        $region54: #{tpu_custom_call.1} parent=51 // pred_check_branch
          %1356 = sbr.rel (%p1354) target = $region56
        $region55: #{tpu_custom_call.1} parent=51 // pred_region
          %s1357 = sand.u32 %s160, 1
          %s1358 = scalar_lea.sflag [#allocation3], %s1357
          %s1359 = sand.u32 %s160, 1
          %s1360 = smul.addr %s1359, 8
          %s1361 = scalar_lea.vmem [#allocation2], %s1360
          %1363 = dma.done %s1358, 128
        $region56: #{tpu_custom_call.1} parent=51 // pred_fallthru
          _
      $region52: #{tpu_custom_call.1} parent=5 // pred_fallthru
        _
    $region6: #{tpu_custom_call.1} parent=1 // loop_footer
      %s19 = sadd.s32 1, %s15
    $region7: #{tpu_custom_call.1} parent=1 // loop_footer_branch
      %14 = sbr.rel target = $region3
    $region8: #{tpu_custom_call.1} parent=1 // loop_exit
      _
    %1364 = vsyncpa [#allocation3], 1
    %s1365 = scalar_lea.sflag [#allocation3], 1
    %1366 = vsyncpa %s1365, 1

</llo_original>
